<compile_context>
chip_gen: v5e
topology: v5e:2x2
jax: 0.10.0
libtpu: 0.0.40
codegen_flags: <defaults>
</compile_context>

<pallas_src>
import functools

import jax
import jax.numpy as jnp
from jax import lax
from jax.experimental import pallas as pl
from jax.experimental.pallas import tpu as pltpu


def _round_up(x, m):
    return ((x + m - 1) // m) * m


def _pick_tile(dim_padded, cap):
    """Largest multiple of 128 that divides dim_padded and is <= cap."""
    best = 128
    t = 128
    limit = min(cap, dim_padded)
    while t <= limit:
        if dim_padded % t == 0:
            best = t
        t += 128
    return best


def _bounds_kernel(bp, w_ref, b_ref, xc_ref, r_ref, o_ref, acc_xc, acc_r):
    k = pl.program_id(1)

    @pl.when(k == 0)
    def _():
        acc_xc[...] = jnp.zeros_like(acc_xc)
        acc_r[...] = jnp.zeros_like(acc_r)

    w = w_ref[...]                                    # (TN, TK)
    dn = (((1,), (1,)), ((), ()))                     # contract last dims: no transpose
    acc_xc[...] += lax.dot_general(xc_ref[...], w, dn,
                                   preferred_element_type=jnp.float32)
    acc_r[...] += lax.dot_general(r_ref[...], jnp.abs(w), dn,
                                  preferred_element_type=jnp.float32)

    @pl.when(k == pl.num_programs(1) - 1)
    def _():
        b = b_ref[...]                                # (1, TN), broadcasts over rows
        xw = acc_xc[0:bp, :]                          # x @ W.T
        cw = acc_xc[bp:2 * bp, :]                     # c @ W.T
        rw = acc_r[...]                               # r @ |W|.T
        o_ref[0:bp, :] = xw + b                       # x_out
        o_ref[bp:2 * bp, :] = (cw - rw) + b           # l_out
        o_ref[2 * bp:3 * bp, :] = (cw + rw) + b       # u_out


def linear_layer_transformer(weight, bias, x, l_in, u_in, *, tn_cap=512, tk_cap=512):
    """weight: (d_out, d_in); bias: (d_out,); x/l_in/u_in: (B, d_in).
    Returns (x_out, l_out, u_out), each (B, d_out), matching the PyTorch
    forward's (x_out.t(), l_out.t(), u_out.t())."""
    f32 = jnp.float32
    d_out, d_in = weight.shape
    B = x.shape[0]

    # Padded sizes: batch -> sublane(8), feature dims -> lane(128) then tile.
    Bp = _round_up(B, 8)
    Dop_min = _round_up(d_out, 128)
    Dip_min = _round_up(d_in, 128)
    TN = _pick_tile(Dop_min, tn_cap)
    TK = _pick_tile(Dip_min, tk_cap)
    Dop = _round_up(Dop_min, TN)
    Dip = _round_up(Dip_min, TK)

    wf = weight.astype(f32)
    bf = bias.reshape(1, d_out).astype(f32)
    xf = x.astype(f32)
    lf = l_in.astype(f32)
    uf = u_in.astype(f32)
    c = (lf + uf) * 0.5
    r = (uf - lf) * 0.5

    # Zero-pad (exact for this math: padded rows/cols contribute nothing).
    w_p = jnp.zeros((Dop, Dip), f32).at[:d_out, :d_in].set(wf)
    b_p = jnp.zeros((1, Dop), f32).at[:, :d_out].set(bf)
    xc_p = (jnp.zeros((2 * Bp, Dip), f32)
            .at[:B, :d_in].set(xf)
            .at[Bp:Bp + B, :d_in].set(c))
    r_p = jnp.zeros((Bp, Dip), f32).at[:B, :d_in].set(r)

    grid = (Dop // TN, Dip // TK)

    slab = pl.pallas_call(
        functools.partial(_bounds_kernel, Bp),
        out_shape=jax.ShapeDtypeStruct((3 * Bp, Dop), f32),
        grid_spec=pltpu.PrefetchScalarGridSpec(
            num_scalar_prefetch=0,
            grid=grid,
            in_specs=[
                pl.BlockSpec((TN, TK), lambda j, k: (j, k)),        # W tile
                pl.BlockSpec((1, TN), lambda j, k: (0, j)),         # bias row tile
                pl.BlockSpec((2 * Bp, TK), lambda j, k: (0, k)),    # [x; c] tile
                pl.BlockSpec((Bp, TK), lambda j, k: (0, k)),        # r tile
            ],
            out_specs=pl.BlockSpec((3 * Bp, TN), lambda j, k: (0, j)),
            scratch_shapes=[
                pltpu.VMEM((2 * Bp, TN), f32),                      # acc for [x; c] @ W.T
                pltpu.VMEM((Bp, TN), f32),                          # acc for r @ |W|.T
            ],
        ),
        compiler_params=pltpu.CompilerParams(
            dimension_semantics=("parallel", "arbitrary")),
    )(w_p, b_p, xc_p, r_p)

    x_out = slab[:B, :d_out]
    l_out = slab[Bp:Bp + B, :d_out]
    u_out = slab[2 * Bp:2 * Bp + B, :d_out]
    return x_out, l_out, u_out


def _reference(weight, bias, x, l_in, u_in):
    """Pure-JAX mirror of the PyTorch forward (clamp-based)."""
    wp = jnp.maximum(weight, 0.0)
    wm = jnp.minimum(weight, 0.0)
    b_col = bias.reshape(-1, 1)
    u_ref = (wp @ u_in.T + wm @ l_in.T + b_col).T
    l_ref = (wp @ l_in.T + wm @ u_in.T + b_col).T
    x_ref = (weight @ x.T + b_col).T
    return x_ref, l_ref, u_ref


if __name__ == "__main__":
    key = jax.random.PRNGKey(0)

    # --- Test 1: module-native small shapes (single-tile grid). ---
    kw, kb, kx, keps = jax.random.split(key, 4)
    B, d_in, d_out = 2, 32, 64
    weight = jax.random.normal(kw, (d_out, d_in), dtype=jnp.float32)
    bias = jax.random.normal(kb, (d_out,), dtype=jnp.float32)
    x = jax.random.normal(kx, (B, d_in), dtype=jnp.float32)
    eps = jnp.abs(jax.random.normal(keps, (B, d_in), dtype=jnp.float32)) * 0.1
    l_in, u_in = x - eps, x + eps

    x_out, l_out, u_out = jax.block_until_ready(
        linear_layer_transformer(weight, bias, x, l_in, u_in))
    x_ref, l_ref, u_ref = _reference(weight, bias, x, l_in, u_in)
    assert jnp.allclose(x_out, x_ref, atol=1e-4, rtol=1e-4)
    assert jnp.allclose(l_out, l_ref, atol=1e-4, rtol=1e-4)
    assert jnp.allclose(u_out, u_ref, atol=1e-4, rtol=1e-4)
    assert bool(jnp.all(l_out <= u_out + 1e-5))

    # --- Test 2: exercises the (parallel, arbitrary) grid with accumulation. ---
    kw2, kb2, kx2, keps2 = jax.random.split(jax.random.PRNGKey(1), 4)
    B2, d_in2, d_out2 = 2, 384, 256
    weight2 = jax.random.normal(kw2, (d_out2, d_in2), dtype=jnp.float32)
    bias2 = jax.random.normal(kb2, (d_out2,), dtype=jnp.float32)
    x2 = jax.random.normal(kx2, (B2, d_in2), dtype=jnp.float32)
    eps2 = jnp.abs(jax.random.normal(keps2, (B2, d_in2), dtype=jnp.float32)) * 0.1
    l2, u2 = x2 - eps2, x2 + eps2

    x_out2, l_out2, u_out2 = jax.block_until_ready(
        linear_layer_transformer(weight2, bias2, x2, l2, u2,
                                 tn_cap=128, tk_cap=128))   # grid = (2, 3)
    x_ref2, l_ref2, u_ref2 = _reference(weight2, bias2, x2, l2, u2)
    assert jnp.allclose(x_out2, x_ref2, atol=1e-3, rtol=1e-4)
    assert jnp.allclose(l_out2, l_ref2, atol=1e-3, rtol=1e-4)
    assert jnp.allclose(u_out2, u_ref2, atol=1e-3, rtol=1e-4)
    assert bool(jnp.all(l_out2 <= u_out2 + 1e-4))

    print("KERNEL_OK")
</pallas_src>

<mosaic_0001>
module attributes {stable_mosaic.version = 11 : i64} {
  func.func @_bounds_kernel(%arg0: i32, %arg1: i32, %arg2: memref<128x128xf32, #tpu.memory_space<vmem>>, %arg3: memref<1x128xf32, #tpu.memory_space<vmem>>, %arg4: memref<16x128xf32, #tpu.memory_space<vmem>>, %arg5: memref<8x128xf32, #tpu.memory_space<vmem>>, %arg6: memref<24x128xf32, #tpu.memory_space<vmem>>, %arg7: memref<16x128xf32, #tpu.memory_space<vmem>>, %arg8: memref<8x128xf32, #tpu.memory_space<vmem>>) attributes {dimension_semantics = [#tpu.dimension_semantics<parallel>, #tpu.dimension_semantics<arbitrary>], iteration_bounds = array<i64: 1, 1>, scalar_prefetch = 0 : i64, scratch_operands = 2 : i64, tpu.core_type = #tpu.core_type<tc>, window_params = [{transform_indices = @transform_0, window_bounds = array<i64: 128, 128>}, {transform_indices = @transform_1, window_bounds = array<i64: 1, 128>}, {transform_indices = @transform_2, window_bounds = array<i64: 16, 128>}, {transform_indices = @transform_3, window_bounds = array<i64: 8, 128>}, {transform_indices = @transform_4, window_bounds = array<i64: 24, 128>}]} {
    %c0_i32 = arith.constant 0 : i32
    %0 = arith.cmpi eq, %arg1, %c0_i32 : i32
    %1 = arith.extui %0 : i1 to i32
    %c0_i32_0 = arith.constant 0 : i32
    %2 = arith.cmpi ne, %1, %c0_i32_0 : i32
    scf.if %2 {
      %cst_17 = arith.constant 0.000000e+00 : f32
      %18 = vector.broadcast %cst_17 : f32 to vector<16x128xf32>
      %c0_18 = arith.constant 0 : index
      %c0_19 = arith.constant 0 : index
      %19 = vector.load %arg7[%c0_18, %c0_19] : memref<16x128xf32, #tpu.memory_space<vmem>>, vector<16x128xf32>
      tpu.vector_store %arg7[%c0_18, %c0_19], %18 {strides = array<i32>} : memref<16x128xf32, #tpu.memory_space<vmem>>, vector<16x128xf32>,
      %cst_20 = arith.constant 0.000000e+00 : f32
      %20 = vector.broadcast %cst_20 : f32 to vector<8x128xf32>
      %c0_21 = arith.constant 0 : index
      %c0_22 = arith.constant 0 : index
      %21 = vector.load %arg8[%c0_21, %c0_22] : memref<8x128xf32, #tpu.memory_space<vmem>>, vector<8x128xf32>
      tpu.vector_store %arg8[%c0_21, %c0_22], %20 {strides = array<i32>} : memref<8x128xf32, #tpu.memory_space<vmem>>, vector<8x128xf32>,
    } else {
    }
    %c0 = arith.constant 0 : index
    %c0_1 = arith.constant 0 : index
    %3 = vector.load %arg2[%c0, %c0_1] : memref<128x128xf32, #tpu.memory_space<vmem>>, vector<128x128xf32>
    %c0_2 = arith.constant 0 : index
    %c0_3 = arith.constant 0 : index
    %4 = vector.load %arg7[%c0_2, %c0_3] : memref<16x128xf32, #tpu.memory_space<vmem>>, vector<16x128xf32>
    %c0_4 = arith.constant 0 : index
    %c0_5 = arith.constant 0 : index
    %5 = vector.load %arg4[%c0_4, %c0_5] : memref<16x128xf32, #tpu.memory_space<vmem>>, vector<16x128xf32>
    %cst = arith.constant dense<0.000000e+00> : vector<16x128xf32>
    %6 = tpu.matmul %5, %3, %cst {dimension_numbers = #tpu.dot_dimension_numbers<[1], [1], [0], [0], [0, 0, 1, 0], [], []>} : vector<16x128xf32>, vector<128x128xf32>, vector<16x128xf32> -> vector<16x128xf32>
    %7 = arith.addf %4, %6 : vector<16x128xf32>
    %c0_6 = arith.constant 0 : index
    %c0_7 = arith.constant 0 : index
    %8 = vector.load %arg7[%c0_6, %c0_7] : memref<16x128xf32, #tpu.memory_space<vmem>>, vector<16x128xf32>
    tpu.vector_store %arg7[%c0_6, %c0_7], %7 {strides = array<i32>} : memref<16x128xf32, #tpu.memory_space<vmem>>, vector<16x128xf32>,
    %c0_8 = arith.constant 0 : index
    %c0_9 = arith.constant 0 : index
    %9 = vector.load %arg8[%c0_8, %c0_9] : memref<8x128xf32, #tpu.memory_space<vmem>>, vector<8x128xf32>
    %c0_10 = arith.constant 0 : index
    %c0_11 = arith.constant 0 : index
    %10 = vector.load %arg5[%c0_10, %c0_11] : memref<8x128xf32, #tpu.memory_space<vmem>>, vector<8x128xf32>
    %11 = math.absf %3 : vector<128x128xf32>
    %cst_12 = arith.constant dense<0.000000e+00> : vector<8x128xf32>
    %12 = tpu.matmul %10, %11, %cst_12 {dimension_numbers = #tpu.dot_dimension_numbers<[1], [1], [0], [0], [0, 0, 1, 0], [], []>} : vector<8x128xf32>, vector<128x128xf32>, vector<8x128xf32> -> vector<8x128xf32>
    %13 = arith.addf %9, %12 : vector<8x128xf32>
    %c0_13 = arith.constant 0 : index
    %c0_14 = arith.constant 0 : index
    %14 = vector.load %arg8[%c0_13, %c0_14] : memref<8x128xf32, #tpu.memory_space<vmem>>, vector<8x128xf32>
    tpu.vector_store %arg8[%c0_13, %c0_14], %13 {strides = array<i32>} : memref<8x128xf32, #tpu.memory_space<vmem>>, vector<8x128xf32>,
    %c0_i32_15 = arith.constant 0 : i32
    %15 = arith.cmpi eq, %arg1, %c0_i32_15 : i32
    %16 = arith.extui %15 : i1 to i32
    %c0_i32_16 = arith.constant 0 : i32
    %17 = arith.cmpi ne, %16, %c0_i32_16 : i32
    scf.if %17 {
      %c0_17 = arith.constant 0 : index
      %c0_18 = arith.constant 0 : index
      %18 = vector.load %arg3[%c0_17, %c0_18] : memref<1x128xf32, #tpu.memory_space<vmem>>, vector<1x128xf32>
      %c0_19 = arith.constant 0 : index
      %c0_20 = arith.constant 0 : index
      %19 = vector.load %arg7[%c0_19, %c0_20] : memref<16x128xf32, #tpu.memory_space<vmem>>, vector<8x128xf32>
      %c8 = arith.constant 8 : index
      %c0_21 = arith.constant 0 : index
      %20 = vector.load %arg7[%c8, %c0_21] : memref<16x128xf32, #tpu.memory_space<vmem>>, vector<8x128xf32>
      %c0_22 = arith.constant 0 : index
      %c0_23 = arith.constant 0 : index
      %21 = vector.load %arg8[%c0_22, %c0_23] : memref<8x128xf32, #tpu.memory_space<vmem>>, vector<8x128xf32>
      %22 = vector.broadcast %18 : vector<1x128xf32> to vector<8x128xf32>
      %23 = arith.addf %19, %22 : vector<8x128xf32>
      %c0_24 = arith.constant 0 : index
      %c0_25 = arith.constant 0 : index
      %24 = vector.load %arg6[%c0_24, %c0_25] : memref<24x128xf32, #tpu.memory_space<vmem>>, vector<8x128xf32>
      tpu.vector_store %arg6[%c0_24, %c0_25], %23 {strides = array<i32>} : memref<24x128xf32, #tpu.memory_space<vmem>>, vector<8x128xf32>,
      %25 = arith.subf %20, %21 : vector<8x128xf32>
      %26 = vector.broadcast %18 : vector<1x128xf32> to vector<8x128xf32>
      %27 = arith.addf %25, %26 : vector<8x128xf32>
      %c8_26 = arith.constant 8 : index
      %c0_27 = arith.constant 0 : index
      %28 = vector.load %arg6[%c8_26, %c0_27] : memref<24x128xf32, #tpu.memory_space<vmem>>, vector<8x128xf32>
      tpu.vector_store %arg6[%c8_26, %c0_27], %27 {strides = array<i32>} : memref<24x128xf32, #tpu.memory_space<vmem>>, vector<8x128xf32>,
      %29 = arith.addf %20, %21 : vector<8x128xf32>
      %30 = vector.broadcast %18 : vector<1x128xf32> to vector<8x128xf32>
      %31 = arith.addf %29, %30 : vector<8x128xf32>
      %c16 = arith.constant 16 : index
      %c0_28 = arith.constant 0 : index
      %32 = vector.load %arg6[%c16, %c0_28] : memref<24x128xf32, #tpu.memory_space<vmem>>, vector<8x128xf32>
      tpu.vector_store %arg6[%c16, %c0_28], %31 {strides = array<i32>} : memref<24x128xf32, #tpu.memory_space<vmem>>, vector<8x128xf32>,
    } else {
    }
    return
  }
  func.func @transform_0(%arg0: i32, %arg1: i32) -> (i32, i32) {
    %c0_i32 = arith.constant 0 : i32
    return %arg0, %arg1 : i32, i32
  }
  func.func @transform_1(%arg0: i32, %arg1: i32) -> (i32, i32) {
    %c0_i32 = arith.constant 0 : i32
    %c0_i32_0 = arith.constant 0 : i32
    return %c0_i32, %arg0 : i32, i32
  }
  func.func @transform_2(%arg0: i32, %arg1: i32) -> (i32, i32) {
    %c0_i32 = arith.constant 0 : i32
    %c0_i32_0 = arith.constant 0 : i32
    return %c0_i32, %arg1 : i32, i32
  }
  func.func @transform_3(%arg0: i32, %arg1: i32) -> (i32, i32) {
    %c0_i32 = arith.constant 0 : i32
    %c0_i32_0 = arith.constant 0 : i32
    return %c0_i32, %arg1 : i32, i32
  }
  func.func @transform_4(%arg0: i32, %arg1: i32) -> (i32, i32) {
    %c0_i32 = arith.constant 0 : i32
    %c0_i32_0 = arith.constant 0 : i32
    return %c0_i32, %arg0 : i32, i32
  }
}

</mosaic_0001>

<llo_original>
// kernel: tpu_custom_call.1
$region0: #{tpu_custom_call.1}
  #allocation0 [shape = 'u32[]', space=smem, size = 0x4, offset = 0x4, fixed_abs, tag = 'smem constant byte address 0x4 - core index']
  #allocation1 [shape = 'u32[72,128]{1,0:T(1,128)}', space=vmem, size = 0x9000, scoped, tag = 'internal scratch']
  #allocation2 [shape = 'f32[16,128]{1,0:T(8,128)}', space=vmem, size = 0x2000, scoped, tag = 'scratch operand']
  #allocation3 [shape = 'f32[8,128]{1,0:T(8,128)}', space=vmem, size = 0x1000, scoped, tag = 'scratch operand']
  %s0 = inlined_call_operand.hbm [shape: f32[128,128], index: 0, kind: input, shape index: {}]
  %s1 = inlined_call_operand.hbm [shape: f32[1,128], index: 1, kind: input, shape index: {}]
  %s2 = inlined_call_operand.hbm [shape: f32[16,128], index: 2, kind: input, shape index: {}]
  %s3 = inlined_call_operand.hbm [shape: f32[8,128], index: 3, kind: input, shape index: {}]
  %s4 = inlined_call_operand.hbm [shape: f32[24,128], index: 4, kind: output, shape index: {}]
  %s5 = sld [smem:[#allocation0]]
  $region50: #{tpu_custom_call.1} parent=0
    _
  %s7 = ssub.s32 1, %s5
  %s8 = scalar_select 0, %s7, %s5
  $region1: #{tpu_custom_call.1} parent=0
    #allocation4 [shape = 'u8[65536]{0}', space=vmem, size = 0x10000, scoped, tag = 'input window, operand 0, single buffered']
    #allocation5 [shape = 's32[1]{0}', space=sflag, size = 0x4, scoped, tag = 'scoped memory for tpu_custom_call.1']
    #allocation6 [shape = 's32[1]{0}', space=sflag, size = 0x4, scoped, tag = 'scoped memory for tpu_custom_call.1']
    #allocation7 [shape = 'u8[512]{0}', space=vmem, size = 0x400, scoped, tag = 'input window, operand 1, single buffered']
    #allocation8 [shape = 's32[1]{0}', space=sflag, size = 0x4, scoped, tag = 'scoped memory for tpu_custom_call.1']
    #allocation9 [shape = 'u8[8192]{0}', space=vmem, size = 0x2000, scoped, tag = 'input window, operand 2, single buffered']
    #allocation10 [shape = 'u8[4096]{0}', space=vmem, size = 0x1000, scoped, tag = 'input window, operand 3, single buffered']
    #allocation11 [shape = 's32[1]{0}', space=sflag, size = 0x4, scoped, tag = 'scoped memory for tpu_custom_call.1']
    #allocation12 [shape = 'u8[12288]{0}', space=vmem, size = 0x3000, scoped, tag = 'output window, operand 0, single buffered']
    %9 = vsyncpa [#allocation5], 0
    %10 = vsyncpa [#allocation8], 0
    %11 = vsyncpa [#allocation11], 0
    %12 = vsyncpa [#allocation6], 0
    // Predicated region
    $region2: #{tpu_custom_call.1} parent=1 // pred_check
      _
    $region3: #{tpu_custom_call.1} parent=1 // pred_check_branch
      %14 = sbr.rel (0) target = $region5
    $region4: #{tpu_custom_call.1} parent=1 // pred_region
      %16 = vsyncadd [#allocation5], 0
      %s17 = sshll.u32 %s0, 4
      %s18 = int_to_ptr.hbm [resolvable:$true] %s17
      %s19 = sshll.u32 [#allocation4], 4
      %s20 = int_to_ptr.vmem [resolvable:$true] %s19
      %25 = dma.hbm_to_vmem [thread:$0]  %s18, 2048, %s20, [#allocation5], 128, 128, 8
    $region5: #{tpu_custom_call.1} parent=1 // pred_fallthru
      _
    // Predicated region
    $region6: #{tpu_custom_call.1} parent=1 // pred_check
      _
    $region7: #{tpu_custom_call.1} parent=1 // pred_check_branch
      %27 = sbr.rel (0) target = $region9
    $region8: #{tpu_custom_call.1} parent=1 // pred_region
      %29 = vsyncadd [#allocation8], 0
      %s31 = sshll.u32 %s1, 4
      %s32 = int_to_ptr.hbm [resolvable:$true] %s31
      %s33 = sshll.u32 [#allocation7], 4
      %s34 = int_to_ptr.vmem [resolvable:$true] %s33
      %36 = dma.hbm_to_vmem [thread:$0]  %s32, 16, %s34, [#allocation8]
    $region9: #{tpu_custom_call.1} parent=1 // pred_fallthru
      _
    // Predicated region
    $region10: #{tpu_custom_call.1} parent=1 // pred_check
      _
    $region11: #{tpu_custom_call.1} parent=1 // pred_check_branch
      %38 = sbr.rel (0) target = $region13
    $region12: #{tpu_custom_call.1} parent=1 // pred_region
      %40 = vsyncadd [#allocation8], 0
      %s41 = sshll.u32 %s2, 4
      %s42 = int_to_ptr.hbm [resolvable:$true] %s41
      %s43 = sshll.u32 [#allocation9], 4
      %s44 = int_to_ptr.vmem [resolvable:$true] %s43
      %49 = dma.hbm_to_vmem [thread:$0]  %s42, 256, %s44, [#allocation8], 128, 128, 8
    $region13: #{tpu_custom_call.1} parent=1 // pred_fallthru
      _
    // Predicated region
    $region14: #{tpu_custom_call.1} parent=1 // pred_check
      _
    $region15: #{tpu_custom_call.1} parent=1 // pred_check_branch
      %51 = sbr.rel (0) target = $region17
    $region16: #{tpu_custom_call.1} parent=1 // pred_region
      %53 = vsyncadd [#allocation11], 0
      %s55 = sshll.u32 %s3, 4
      %s56 = int_to_ptr.hbm [resolvable:$true] %s55
      %s57 = sshll.u32 [#allocation10], 4
      %s58 = int_to_ptr.vmem [resolvable:$true] %s57
      %60 = dma.hbm_to_vmem [thread:$0]  %s56, 128, %s58, [#allocation11]
    $region17: #{tpu_custom_call.1} parent=1 // pred_fallthru
      _
    // Predicated region
    $region18: #{tpu_custom_call.1} parent=1 // pred_check
      _
    $region19: #{tpu_custom_call.1} parent=1 // pred_check_branch
      %62 = sbr.rel (0) target = $region21
    $region20: #{tpu_custom_call.1} parent=1 // pred_region
      %64 = dma.done [#allocation5], 2048
    $region21: #{tpu_custom_call.1} parent=1 // pred_fallthru
      _
    // Predicated region
    $region22: #{tpu_custom_call.1} parent=1 // pred_check
      _
    $region23: #{tpu_custom_call.1} parent=1 // pred_check_branch
      %66 = sbr.rel (0) target = $region25
    $region24: #{tpu_custom_call.1} parent=1 // pred_region
      %68 = dma.done [#allocation8], 16
    $region25: #{tpu_custom_call.1} parent=1 // pred_fallthru
      _
    // Predicated region
    $region26: #{tpu_custom_call.1} parent=1 // pred_check
      _
    $region27: #{tpu_custom_call.1} parent=1 // pred_check_branch
      %70 = sbr.rel (0) target = $region29
    $region28: #{tpu_custom_call.1} parent=1 // pred_region
      %72 = dma.done [#allocation8], 256
    $region29: #{tpu_custom_call.1} parent=1 // pred_fallthru
      _
    // Predicated region
    $region30: #{tpu_custom_call.1} parent=1 // pred_check
      _
    $region31: #{tpu_custom_call.1} parent=1 // pred_check_branch
      %74 = sbr.rel (0) target = $region33
    $region32: #{tpu_custom_call.1} parent=1 // pred_region
      %76 = dma.done [#allocation11], 128
    $region33: #{tpu_custom_call.1} parent=1 // pred_fallthru
      _
    %p77 = scmp.eq.s32.totalorder 0, 0
    // Predicated region
    $region34: #{tpu_custom_call.1} parent=1 // pred_check
      %p78 = pneg %p77
    $region35: #{tpu_custom_call.1} parent=1 // pred_check_branch
      %80 = sbr.rel (%p78) target = $region37
    $region36: #{tpu_custom_call.1} parent=1 // pred_region
      %81 = vst [vmem:[#allocation2] sm:$0xff] 0.0
      %82 = vst [vmem:[#allocation2 + $0x8] sm:$0xff] 0.0
      %83 = vst [vmem:[#allocation3] sm:$0xff] 0.0
    $region37: #{tpu_custom_call.1} parent=1 // pred_fallthru
      _
    %v84 = vld [vmem:[#allocation4] sm:$0xff]
    %v85 = vld [vmem:[#allocation4 + $0x8] sm:$0xff]
    %v86 = vld [vmem:[#allocation4 + $0x10] sm:$0xff]
    %v87 = vld [vmem:[#allocation4 + $0x18] sm:$0xff]
    %v88 = vld [vmem:[#allocation4 + $0x20] sm:$0xff]
    %v89 = vld [vmem:[#allocation4 + $0x28] sm:$0xff]
    %v90 = vld [vmem:[#allocation4 + $0x30] sm:$0xff]
    %v91 = vld [vmem:[#allocation4 + $0x38] sm:$0xff]
    %v92 = vld [vmem:[#allocation4 + $0x40] sm:$0xff]
    %v93 = vld [vmem:[#allocation4 + $0x48] sm:$0xff]
    %v94 = vld [vmem:[#allocation4 + $0x50] sm:$0xff]
    %v95 = vld [vmem:[#allocation4 + $0x58] sm:$0xff]
    %v96 = vld [vmem:[#allocation4 + $0x60] sm:$0xff]
    %v97 = vld [vmem:[#allocation4 + $0x68] sm:$0xff]
    %v98 = vld [vmem:[#allocation4 + $0x70] sm:$0xff]
    %v99 = vld [vmem:[#allocation4 + $0x78] sm:$0xff]
    %v100 = vld [vmem:[#allocation2] sm:$0xff]
    %v101 = vld [vmem:[#allocation2 + $0x8] sm:$0xff]
    %v102 = vld [vmem:[#allocation9] sm:$0xff]
    %v103 = vld [vmem:[#allocation9 + $0x8] sm:$0xff]
    %104 = vmatpush.xpose.msra.mxu0 %v99
    %105 = vmatpush.xpose.msra.mxu0 %v98
    %106 = vmatpush.xpose.msra.mxu0 %v97
    %107 = vmatpush.xpose.msra.mxu0 %v96
    %108 = vmatpush.xpose.msra.mxu0 %v95
    %109 = vmatpush.xpose.msra.mxu0 %v94
    %110 = vmatpush.xpose.msra.mxu0 %v93
    %111 = vmatpush.xpose.msra.mxu0 %v92
    %112 = vmatpush.xpose.msra.mxu0 %v91
    %113 = vmatpush.xpose.msra.mxu0 %v90
    %114 = vmatpush.xpose.msra.mxu0 %v89
    %115 = vmatpush.xpose.msra.mxu0 %v88
    %116 = vmatpush.xpose.msra.mxu0 %v87
    %117 = vmatpush.xpose.msra.mxu0 %v86
    %118 = vmatpush.xpose.msra.mxu0 %v85
    %119 = vmatpush.xpose.msra.mxu0 %v84
    %120 = vmatmul.f32.gmra.mxu0 %v102
    %v121 = vpop.f32.mrf.mxu0
    %v122 = vadd.f32 0.0, %v121
    %123 = vmatmul.f32.gmra.mxu0 %v103
    %v124 = vpop.f32.mrf.mxu0
    %v125 = vadd.f32 0.0, %v124
    %126 = vdwg.mxu0
    %v127 = vadd.f32 %v100, %v122
    %v128 = vadd.f32 %v101, %v125
    %129 = vst [vmem:[#allocation2] sm:$0xff] %v127
    %130 = vst [vmem:[#allocation2 + $0x8] sm:$0xff] %v128
    %v131 = vld [vmem:[#allocation3] sm:$0xff]
    %v132 = vld [vmem:[#allocation10] sm:$0xff]
    %v133 = vand.u32 2147483647, %v84
    %v134 = vand.u32 2147483647, %v85
    %v135 = vand.u32 2147483647, %v86
    %v136 = vand.u32 2147483647, %v87
    %v137 = vand.u32 2147483647, %v88
    %v138 = vand.u32 2147483647, %v89
    %v139 = vand.u32 2147483647, %v90
    %v140 = vand.u32 2147483647, %v91
    %v141 = vand.u32 2147483647, %v92
    %v142 = vand.u32 2147483647, %v93
    %v143 = vand.u32 2147483647, %v94
    %v144 = vand.u32 2147483647, %v95
    %v145 = vand.u32 2147483647, %v96
    %v146 = vand.u32 2147483647, %v97
    %v147 = vand.u32 2147483647, %v98
    %v148 = vand.u32 2147483647, %v99
    %149 = vmatpush.xpose.msra.mxu0 %v148
    %150 = vmatpush.xpose.msra.mxu0 %v147
    %151 = vmatpush.xpose.msra.mxu0 %v146
    %152 = vmatpush.xpose.msra.mxu0 %v145
    %153 = vmatpush.xpose.msra.mxu0 %v144
    %154 = vmatpush.xpose.msra.mxu0 %v143
    %155 = vmatpush.xpose.msra.mxu0 %v142
    %156 = vmatpush.xpose.msra.mxu0 %v141
    %157 = vmatpush.xpose.msra.mxu0 %v140
    %158 = vmatpush.xpose.msra.mxu0 %v139
    %159 = vmatpush.xpose.msra.mxu0 %v138
    %160 = vmatpush.xpose.msra.mxu0 %v137
    %161 = vmatpush.xpose.msra.mxu0 %v136
    %162 = vmatpush.xpose.msra.mxu0 %v135
    %163 = vmatpush.xpose.msra.mxu0 %v134
    %164 = vmatpush.xpose.msra.mxu0 %v133
    %165 = vmatmul.f32.gmra.mxu0 %v132
    %v166 = vpop.f32.mrf.mxu0
    %v167 = vadd.f32 0.0, %v166
    %168 = vdwg.mxu0
    %v169 = vadd.f32 %v131, %v167
    %170 = vst [vmem:[#allocation3] sm:$0xff] %v169
    // Predicated region
    $region38: #{tpu_custom_call.1} parent=1 // pred_check
      %p171 = pneg %p77
    $region39: #{tpu_custom_call.1} parent=1 // pred_check_branch
      %173 = sbr.rel (%p171) target = $region41
    $region40: #{tpu_custom_call.1} parent=1 // pred_region
      %v174 = vld [vmem:[#allocation7] sm:$0x1]
      %v175 = vld [vmem:[#allocation2] sm:$0xff]
      %v176 = vld [vmem:[#allocation2 + $0x8] sm:$0xff]
      %v177 = vld [vmem:[#allocation3] sm:$0xff]
      %v179 = vperm.slane %v174, 0
      %v181 = vadd.f32 %v175, %v179
      %182 = vst [vmem:[#allocation12] sm:$0xff] %v181
      %v183 = vsub.f32 %v176, %v177
      %v184 = vadd.f32 %v183, %v179
      %185 = vst [vmem:[#allocation12 + $0x8] sm:$0xff] %v184
      %v186 = vadd.f32 %v176, %v177
      %v187 = vadd.f32 %v186, %v179
      %188 = vst [vmem:[#allocation12 + $0x10] sm:$0xff] %v187
    $region41: #{tpu_custom_call.1} parent=1 // pred_fallthru
      _
    // Predicated region
    $region42: #{tpu_custom_call.1} parent=1 // pred_check
      _
    $region43: #{tpu_custom_call.1} parent=1 // pred_check_branch
      %190 = sbr.rel (0) target = $region45
    $region44: #{tpu_custom_call.1} parent=1 // pred_region
      %192 = vsyncadd [#allocation6], 0
      %s193 = sshll.u32 [#allocation12], 4
      %s194 = int_to_ptr.vmem [resolvable:$true] %s193
      %s195 = sshll.u32 %s4, 4
      %s196 = int_to_ptr.hbm [resolvable:$true] %s195
      %201 = dma.vmem_to_hbm [thread:$0]  %s194, 384, %s196, [#allocation6], 128, 128, 8
    $region45: #{tpu_custom_call.1} parent=1 // pred_fallthru
      _
    // Predicated region
    $region46: #{tpu_custom_call.1} parent=1 // pred_check
      _
    $region47: #{tpu_custom_call.1} parent=1 // pred_check_branch
      %203 = sbr.rel (0) target = $region49
    $region48: #{tpu_custom_call.1} parent=1 // pred_region
      %205 = dma.done [#allocation6], 384
    $region49: #{tpu_custom_call.1} parent=1 // pred_fallthru
      _
    %206 = vsyncpa [#allocation5], 1
    %207 = vsyncpa [#allocation8], 1
    %208 = vsyncpa [#allocation11], 1
    %209 = vsyncpa [#allocation6], 1

</llo_original>
